<compile_context>
chip_gen: v7x
topology: tpu7x:2x2x1
jax: 0.10.0
libtpu: 0.0.40
codegen_flags: <defaults>
</compile_context>

<pallas_src>
import jax
import jax.numpy as jnp
import numpy as np
from jax.experimental import pallas as pl
from jax.experimental.pallas import tpu as pltpu

LAYER1 = 64      # input / output feature dim
LAYER2 = 32      # first/last hidden layer
HIDDEN = 5       # bottleneck (logical)
HIDDEN_PAD = 8   # bottleneck padded to a full f32 sublane


def _round_up(n, m):
    return ((n + m - 1) // m) * m


def autoencoder_kernel(xT_ref,
                       w1_ref, b1_ref,
                       w2_ref, b2_ref,
                       w3_ref, b3_ref,
                       w4_ref, b4_ref,
                       oT_ref):
    """Fused 4-layer MLP on one transposed batch tile; all tensors are (features, tb)."""
    xT = xT_ref[...]                                                        # (64, tb)

    # encode
    h1 = jnp.dot(w1_ref[...], xT, preferred_element_type=jnp.float32) + b1_ref[...]
    h1 = jnp.maximum(h1, 0.0)                                               # (32, tb)
    h2 = jnp.dot(w2_ref[...], h1, preferred_element_type=jnp.float32) + b2_ref[...]
    h2 = jnp.maximum(h2, 0.0)                                               # (8, tb)  padded bottleneck

    # decode
    h3 = jnp.dot(w3_ref[...], h2, preferred_element_type=jnp.float32) + b3_ref[...]
    h3 = jnp.maximum(h3, 0.0)                                               # (32, tb)
    out = jnp.dot(w4_ref[...], h3, preferred_element_type=jnp.float32) + b4_ref[...]
    oT_ref[...] = out.astype(oT_ref.dtype)                                  # (64, tb) lane-dense store


def autoencoder_forward(x, params, *, tb=None):
    """x: (B, 64) or (B, 1, 64) float32.  Returns (B, 1, 64), matching PyTorch forward."""
    if x.ndim == 3:
        assert x.shape[1] == 1, "expected (B, 1, 64) input"
        x = x[:, 0, :]
    B, F = x.shape
    assert F == LAYER1

    # ---- batch tile selection (batch is the lane axis => multiple of 128) ----
    if tb is None:
        tb = 2048                       # fits comfortably in scoped VMEM on v5e/v6e/v7x
    tb = min(tb, _round_up(B, 128))
    assert tb % 128 == 0, "batch tile must be a multiple of 128 (lane width)"
    B_pad = _round_up(B, tb)

    (w1, b1), (w2, b2), (w3, b3), (w4, b4) = params

    # ---- wrapper-side layout prep (pure glue, runs once) ----
    # Zero-pad the 5-wide bottleneck to 8 for sublane-aligned layouts.
    w2p = jnp.zeros((HIDDEN_PAD, LAYER2), w2.dtype).at[:HIDDEN, :].set(w2)
    b2p = jnp.zeros((HIDDEN_PAD,), b2.dtype).at[:HIDDEN].set(b2)
    w3p = jnp.zeros((LAYER2, HIDDEN_PAD), w3.dtype).at[:, :HIDDEN].set(w3)
    # Biases as column vectors: broadcast over the lane (batch) axis in-kernel.
    b1c = b1.reshape(LAYER2, 1)
    b2c = b2p.reshape(HIDDEN_PAD, 1)
    b3c = b3.reshape(LAYER2, 1)
    b4c = b4.reshape(LAYER1, 1)

    # Transpose activations so batch is the lane axis; pad batch up to the tile.
    xT = x.T                                                               # (64, B)
    if B_pad != B:
        xT = jnp.pad(xT, ((0, 0), (0, B_pad - B)))

    def replicated(arr):
        # whole-array block, identical for every grid step (weights / biases)
        return pl.BlockSpec(arr.shape, lambda i: (0, 0))

    grid = (B_pad // tb,)

    outT = pl.pallas_call(
        autoencoder_kernel,
        out_shape=jax.ShapeDtypeStruct((LAYER1, B_pad), x.dtype),
        grid_spec=pltpu.PrefetchScalarGridSpec(
            num_scalar_prefetch=0,
            grid=grid,
            in_specs=[
                pl.BlockSpec((LAYER1, tb), lambda i: (0, i)),              # x^T tile
                replicated(w1), replicated(b1c),
                replicated(w2p), replicated(b2c),
                replicated(w3p), replicated(b3c),
                replicated(w4), replicated(b4c),
            ],
            out_specs=pl.BlockSpec((LAYER1, tb), lambda i: (0, i)),        # lane-dense out tile
        ),
        compiler_params=pltpu.CompilerParams(
            dimension_semantics=("parallel",),   # megacore-shard batch tiles on v7x
            vmem_limit_bytes=32 * 1024 * 1024,   # explicit; plenty for tb <= ~16K
        ),
    )(xT, w1, b1c, w2p, b2c, w3p, b3c, w4, b4c)

    out = outT[:, :B].T                                                    # (B, 64)
    return out.reshape(B, 1, LAYER1)


def init_params(key):
    """Deterministic params matching nn.Linear shapes/init (U(-1/sqrt(in), 1/sqrt(in)))."""
    dims = [(LAYER1, LAYER2), (LAYER2, HIDDEN), (HIDDEN, LAYER2), (LAYER2, LAYER1)]
    params = []
    for (fan_in, fan_out) in dims:
        key, kw, kb = jax.random.split(key, 3)
        bound = 1.0 / np.sqrt(fan_in)
        w = jax.random.uniform(kw, (fan_out, fan_in), jnp.float32, -bound, bound)
        b = jax.random.uniform(kb, (fan_out,), jnp.float32, -bound, bound)
        params.append((w, b))
    return params


def reference_forward(x, params):
    """Pure-JAX reference of the PyTorch forward."""
    if x.ndim == 2:
        x = x[:, None, :]
    (w1, b1), (w2, b2), (w3, b3), (w4, b4) = params
    h = jnp.maximum(x @ w1.T + b1, 0.0)
    h = jnp.maximum(h @ w2.T + b2, 0.0)
    h = jnp.maximum(h @ w3.T + b3, 0.0)
    return h @ w4.T + b4


if __name__ == "__main__":
    key = jax.random.PRNGKey(0)
    kx, kp = jax.random.split(key)

    B = 512   # small, but enough for several lane-dense batch tiles
    x = jax.random.uniform(kx, (B, LAYER1), jnp.float32)  # normalized waveforms in [0,1)
    params = init_params(kp)

    out = autoencoder_forward(x, params, tb=128)          # 4 pipelined grid steps
    out = jax.block_until_ready(out)

    ref = reference_forward(x, params)
    assert out.shape == (B, 1, LAYER1)
    np.testing.assert_allclose(np.asarray(out), np.asarray(ref), rtol=1e-5, atol=1e-5)

    print("KERNEL_OK")
</pallas_src>

<mosaic_0001>
module attributes {stable_mosaic.version = 11 : i64} {
  func.func @autoencoder_kernel(%arg0: i32, %arg1: memref<64x128xf32, #tpu.memory_space<vmem>>, %arg2: memref<32x64xf32, #tpu.memory_space<vmem>>, %arg3: memref<32x1xf32, #tpu.memory_space<vmem>>, %arg4: memref<8x32xf32, #tpu.memory_space<vmem>>, %arg5: memref<8x1xf32, #tpu.memory_space<vmem>>, %arg6: memref<32x8xf32, #tpu.memory_space<vmem>>, %arg7: memref<32x1xf32, #tpu.memory_space<vmem>>, %arg8: memref<64x32xf32, #tpu.memory_space<vmem>>, %arg9: memref<64x1xf32, #tpu.memory_space<vmem>>, %arg10: memref<64x128xf32, #tpu.memory_space<vmem>>) attributes {dimension_semantics = [#tpu.dimension_semantics<parallel>], iteration_bounds = array<i64: 4>, scalar_prefetch = 0 : i64, scratch_operands = 0 : i64, tpu.core_type = #tpu.core_type<tc>, window_params = [{transform_indices = @transform_0, window_bounds = array<i64: 64, 128>}, {pipeline_mode = #tpu.pipeline_mode<synchronous>, transform_indices = @transform_1, window_bounds = array<i64: 32, 64>}, {pipeline_mode = #tpu.pipeline_mode<synchronous>, transform_indices = @transform_2, window_bounds = array<i64: 32, 1>}, {pipeline_mode = #tpu.pipeline_mode<synchronous>, transform_indices = @transform_3, window_bounds = array<i64: 8, 32>}, {pipeline_mode = #tpu.pipeline_mode<synchronous>, transform_indices = @transform_4, window_bounds = array<i64: 8, 1>}, {pipeline_mode = #tpu.pipeline_mode<synchronous>, transform_indices = @transform_5, window_bounds = array<i64: 32, 8>}, {pipeline_mode = #tpu.pipeline_mode<synchronous>, transform_indices = @transform_6, window_bounds = array<i64: 32, 1>}, {pipeline_mode = #tpu.pipeline_mode<synchronous>, transform_indices = @transform_7, window_bounds = array<i64: 64, 32>}, {pipeline_mode = #tpu.pipeline_mode<synchronous>, transform_indices = @transform_8, window_bounds = array<i64: 64, 1>}, {transform_indices = @transform_9, window_bounds = array<i64: 64, 128>}]} {
    %c0 = arith.constant 0 : index
    %c0_0 = arith.constant 0 : index
    %0 = vector.load %arg1[%c0, %c0_0] : memref<64x128xf32, #tpu.memory_space<vmem>>, vector<64x128xf32>
    %c0_1 = arith.constant 0 : index
    %c0_2 = arith.constant 0 : index
    %1 = vector.load %arg2[%c0_1, %c0_2] : memref<32x64xf32, #tpu.memory_space<vmem>>, vector<32x64xf32>
    %cst = arith.constant dense<0.000000e+00> : vector<32x128xf32>
    %2 = tpu.matmul %1, %0, %cst {dimension_numbers = #tpu.dot_dimension_numbers<[1], [0], [0], [1], [0, 0, 1, 1], [], []>} : vector<32x64xf32>, vector<64x128xf32>, vector<32x128xf32> -> vector<32x128xf32>
    %c0_3 = arith.constant 0 : index
    %c0_4 = arith.constant 0 : index
    %3 = vector.load %arg3[%c0_3, %c0_4] : memref<32x1xf32, #tpu.memory_space<vmem>>, vector<32x1xf32>
    %4 = vector.broadcast %3 : vector<32x1xf32> to vector<32x128xf32>
    %5 = arith.addf %2, %4 : vector<32x128xf32>
    %cst_5 = arith.constant 0.000000e+00 : f32
    %6 = vector.broadcast %cst_5 : f32 to vector<32x128xf32>
    %7 = arith.maximumf %5, %6 : vector<32x128xf32>
    %c0_6 = arith.constant 0 : index
    %c0_7 = arith.constant 0 : index
    %8 = vector.load %arg4[%c0_6, %c0_7] : memref<8x32xf32, #tpu.memory_space<vmem>>, vector<8x32xf32>
    %cst_8 = arith.constant dense<0.000000e+00> : vector<8x128xf32>
    %9 = tpu.matmul %8, %7, %cst_8 {dimension_numbers = #tpu.dot_dimension_numbers<[1], [0], [0], [1], [0, 0, 1, 1], [], []>} : vector<8x32xf32>, vector<32x128xf32>, vector<8x128xf32> -> vector<8x128xf32>
    %c0_9 = arith.constant 0 : index
    %c0_10 = arith.constant 0 : index
    %10 = vector.load %arg5[%c0_9, %c0_10] : memref<8x1xf32, #tpu.memory_space<vmem>>, vector<8x1xf32>
    %11 = vector.broadcast %10 : vector<8x1xf32> to vector<8x128xf32>
    %12 = arith.addf %9, %11 : vector<8x128xf32>
    %cst_11 = arith.constant 0.000000e+00 : f32
    %13 = vector.broadcast %cst_11 : f32 to vector<8x128xf32>
    %14 = arith.maximumf %12, %13 : vector<8x128xf32>
    %c0_12 = arith.constant 0 : index
    %c0_13 = arith.constant 0 : index
    %15 = vector.load %arg6[%c0_12, %c0_13] : memref<32x8xf32, #tpu.memory_space<vmem>>, vector<32x8xf32>
    %cst_14 = arith.constant dense<0.000000e+00> : vector<32x128xf32>
    %16 = tpu.matmul %15, %14, %cst_14 {dimension_numbers = #tpu.dot_dimension_numbers<[1], [0], [0], [1], [0, 0, 1, 1], [], []>} : vector<32x8xf32>, vector<8x128xf32>, vector<32x128xf32> -> vector<32x128xf32>
    %c0_15 = arith.constant 0 : index
    %c0_16 = arith.constant 0 : index
    %17 = vector.load %arg7[%c0_15, %c0_16] : memref<32x1xf32, #tpu.memory_space<vmem>>, vector<32x1xf32>
    %18 = vector.broadcast %17 : vector<32x1xf32> to vector<32x128xf32>
    %19 = arith.addf %16, %18 : vector<32x128xf32>
    %cst_17 = arith.constant 0.000000e+00 : f32
    %20 = vector.broadcast %cst_17 : f32 to vector<32x128xf32>
    %21 = arith.maximumf %19, %20 : vector<32x128xf32>
    %c0_18 = arith.constant 0 : index
    %c0_19 = arith.constant 0 : index
    %22 = vector.load %arg8[%c0_18, %c0_19] : memref<64x32xf32, #tpu.memory_space<vmem>>, vector<64x32xf32>
    %cst_20 = arith.constant dense<0.000000e+00> : vector<64x128xf32>
    %23 = tpu.matmul %22, %21, %cst_20 {dimension_numbers = #tpu.dot_dimension_numbers<[1], [0], [0], [1], [0, 0, 1, 1], [], []>} : vector<64x32xf32>, vector<32x128xf32>, vector<64x128xf32> -> vector<64x128xf32>
    %c0_21 = arith.constant 0 : index
    %c0_22 = arith.constant 0 : index
    %24 = vector.load %arg9[%c0_21, %c0_22] : memref<64x1xf32, #tpu.memory_space<vmem>>, vector<64x1xf32>
    %25 = vector.broadcast %24 : vector<64x1xf32> to vector<64x128xf32>
    %26 = arith.addf %23, %25 : vector<64x128xf32>
    %c0_23 = arith.constant 0 : index
    %c0_24 = arith.constant 0 : index
    %27 = vector.load %arg10[%c0_23, %c0_24] : memref<64x128xf32, #tpu.memory_space<vmem>>, vector<64x128xf32>
    tpu.vector_store %arg10[%c0_23, %c0_24], %26 {strides = array<i32>} : memref<64x128xf32, #tpu.memory_space<vmem>>, vector<64x128xf32>,
    return
  }
  func.func @transform_0(%arg0: i32) -> (i32, i32) {
    %c0_i32 = arith.constant 0 : i32
    %c0_i32_0 = arith.constant 0 : i32
    return %c0_i32, %arg0 : i32, i32
  }
  func.func @transform_1(%arg0: i32) -> (i32, i32) {
    %c0_i32 = arith.constant 0 : i32
    %c0_i32_0 = arith.constant 0 : i32
    %c0_i32_1 = arith.constant 0 : i32
    return %c0_i32, %c0_i32_0 : i32, i32
  }
  func.func @transform_2(%arg0: i32) -> (i32, i32) {
    %c0_i32 = arith.constant 0 : i32
    %c0_i32_0 = arith.constant 0 : i32
    %c0_i32_1 = arith.constant 0 : i32
    return %c0_i32, %c0_i32_0 : i32, i32
  }
  func.func @transform_3(%arg0: i32) -> (i32, i32) {
    %c0_i32 = arith.constant 0 : i32
    %c0_i32_0 = arith.constant 0 : i32
    %c0_i32_1 = arith.constant 0 : i32
    return %c0_i32, %c0_i32_0 : i32, i32
  }
  func.func @transform_4(%arg0: i32) -> (i32, i32) {
    %c0_i32 = arith.constant 0 : i32
    %c0_i32_0 = arith.constant 0 : i32
    %c0_i32_1 = arith.constant 0 : i32
    return %c0_i32, %c0_i32_0 : i32, i32
  }
  func.func @transform_5(%arg0: i32) -> (i32, i32) {
    %c0_i32 = arith.constant 0 : i32
    %c0_i32_0 = arith.constant 0 : i32
    %c0_i32_1 = arith.constant 0 : i32
    return %c0_i32, %c0_i32_0 : i32, i32
  }
  func.func @transform_6(%arg0: i32) -> (i32, i32) {
    %c0_i32 = arith.constant 0 : i32
    %c0_i32_0 = arith.constant 0 : i32
    %c0_i32_1 = arith.constant 0 : i32
    return %c0_i32, %c0_i32_0 : i32, i32
  }
  func.func @transform_7(%arg0: i32) -> (i32, i32) {
    %c0_i32 = arith.constant 0 : i32
    %c0_i32_0 = arith.constant 0 : i32
    %c0_i32_1 = arith.constant 0 : i32
    return %c0_i32, %c0_i32_0 : i32, i32
  }
  func.func @transform_8(%arg0: i32) -> (i32, i32) {
    %c0_i32 = arith.constant 0 : i32
    %c0_i32_0 = arith.constant 0 : i32
    %c0_i32_1 = arith.constant 0 : i32
    return %c0_i32, %c0_i32_0 : i32, i32
  }
  func.func @transform_9(%arg0: i32) -> (i32, i32) {
    %c0_i32 = arith.constant 0 : i32
    %c0_i32_0 = arith.constant 0 : i32
    return %c0_i32, %arg0 : i32, i32
  }
}

</mosaic_0001>

<llo_original>
// kernel: tpu_custom_call.1
$region0: #{tpu_custom_call.1}
  #allocation0 [shape = 'u32[]', space=smem, size = 0x4, offset = 0x4, fixed_abs, tag = 'smem constant byte address 0x4 - core index']
  #allocation1 [shape = 'u32[144,128]{1,0:T(1,128)}', space=vmem, size = 0x12000, scoped, tag = 'internal scratch']
  %s0 = inlined_call_operand.vmem [shape: f32[64,512], index: 0, kind: input, shape index: {}]
  %s1 = inlined_call_operand.hbm [shape: f32[32,64], index: 1, kind: input, shape index: {}]
  %s2 = inlined_call_operand.vmem [shape: f32[32,1], index: 2, kind: input, shape index: {}]
  %s3 = inlined_call_operand.hbm [shape: f32[8,32], index: 3, kind: input, shape index: {}]
  %s4 = inlined_call_operand.vmem [shape: f32[8,1], index: 4, kind: input, shape index: {}]
  %s5 = inlined_call_operand.vmem [shape: f32[32,8], index: 5, kind: input, shape index: {}]
  %s6 = inlined_call_operand.vmem [shape: f32[32,1], index: 6, kind: input, shape index: {}]
  %s7 = inlined_call_operand.vmem [shape: f32[64,32], index: 7, kind: input, shape index: {}]
  %s8 = inlined_call_operand.vmem [shape: f32[64,1], index: 8, kind: input, shape index: {}]
  %s9 = inlined_call_operand.hbm [shape: f32[64,512], index: 9, kind: output, shape index: {}]
  %s10 = sld [smem:[#allocation0]]
  $region115: #{tpu_custom_call.1} parent=0
    _
  %s12 = ssub.s32 1, %s10
  %s13 = scalar_select 0, %s12, %s10
  $region1: #{tpu_custom_call.1} parent=0
    #allocation2 [shape = 'u8[65536]{0}', space=vmem, size = 0x10000, scoped, tag = 'input window, operand 0']
    #allocation3 [shape = 'u8[16384]{0}', space=vmem, size = 0x4000, scoped, tag = 'input window, operand 1, single buffered']
    #allocation4 [shape = 's32[2]{0}', space=sflag, size = 0x8, scoped, tag = 'scoped memory for tpu_custom_call.1']
    #allocation5 [shape = 's32[2]{0}', space=sflag, size = 0x8, scoped, tag = 'scoped memory for tpu_custom_call.1']
    #allocation6 [shape = 'u8[4096]{0}', space=vmem, size = 0x1000, scoped, tag = 'input window, operand 3, single buffered']
    #allocation7 [shape = 's32[1]{0}', space=sflag, size = 0x4, scoped, tag = 'scoped memory for tpu_custom_call.1']
    #allocation8 [shape = 'u8[65536]{0}', space=vmem, size = 0x10000, scoped, tag = 'output window, operand 0']
    %14 = vsyncpa [#allocation4], 0
    %15 = vsyncpa [#allocation7], 0
    %16 = vsyncpa [#allocation5], 0
    %s17 = scalar_lea.sflag [#allocation5], 1
    %18 = vsyncpa %s17, 0
    loop: start=0, step=1, limit=6
    $region2: #{tpu_custom_call.1} parent=1 // loop_pre_header
      _
    $region3: #{tpu_custom_call.1} parent=1 // loop_header
      %s20 = sphi 0, %s24
      %p21 = scmp.ge.s32.totalorder %s20, 6
      %s30 = sphi 0, %s32
      %s33 = sphi 0, %s30
      %s34 = sphi 0, %s33
      %s50 = sphi 0, %s34
      %s54 = sphi 0, %s54
      %s56 = sphi 0, %s54
      %s57 = sphi 0, %s56
      %s71 = sphi 0, %s57
      %s75 = sphi 0, %s75
      %s77 = sphi 0, %s75
      %s78 = sphi 0, %s77
      %s92 = sphi 0, %s78
      %s96 = sphi 0, %s96
      %s98 = sphi 0, %s96
      %s99 = sphi 0, %s98
      %s113 = sphi 0, %s99
      %s117 = sphi 0, %s117
      %s119 = sphi 0, %s117
      %s120 = sphi 0, %s119
      %s134 = sphi 0, %s120
      %s138 = sphi 0, %s138
      %s140 = sphi 0, %s138
      %s141 = sphi 0, %s140
      %s155 = sphi 0, %s141
      %s159 = sphi 0, %s159
      %s161 = sphi 0, %s159
      %s162 = sphi 0, %s161
      %s176 = sphi 0, %s162
      %s180 = sphi 0, %s180
      %s182 = sphi 0, %s180
      %s183 = sphi 0, %s182
      %s197 = sphi 0, %s183
      %s201 = sphi 0, %s201
      %s203 = sphi 0, %s201
      %s204 = sphi 0, %s203
      %s218 = sphi 0, %s204
      %s224 = sphi 0, %s226
      %s227 = sphi 0, %s224
      %s228 = sphi 0, %s227
      %s244 = sphi 0, %s228
    $region4: #{tpu_custom_call.1} parent=1 // loop_header_branch
      %23 = sbr.rel (%p21) target = $region8
    $region5: #{tpu_custom_call.1} parent=1 // loop_body
      %s25 = ssub.s32 %s20, 1
      %s26 = ssub.s32 %s20, 2
      %s27 = sadd.s32 %s20, 1
      %s28 = ssub.s32 %s20, %s27
      %p29 = scmp.eq.s32.totalorder %s28, 0
      %s31 = sadd.s32 %s30, 1
      %s32 = scalar_select %p29, %s30, %s31
      %p35 = pneg %p29
      %p36 = scmp.eq.s32.totalorder %s20, 3
      %p37 = por %p35, %p36
      %p38 = scmp.ne.s32.totalorder %s30, %s33
      %p39 = scmp.eq.s32.totalorder %s20, 0
      %p40 = por %p38, %p39
      %p41 = scmp.ne.s32.totalorder %s30, %s33
      %p42 = scmp.eq.s32.totalorder %s25, 3
      %p43 = por %p41, %p42
      %p44 = scmp.ne.s32.totalorder %s33, %s34
      %p45 = scmp.eq.s32.totalorder %s25, 0
      %p46 = por %p44, %p45
      %p47 = scmp.ne.s32.totalorder %s33, %s34
      %p48 = scmp.eq.s32.totalorder %s26, 3
      %p49 = por %p47, %p48
      %p51 = scmp.ne.s32.totalorder %s34, %s50
      %p52 = scmp.eq.s32.totalorder %s26, 0
      %p53 = por %p51, %p52
      %s55 = sadd.s32 %s54, 1
      %p58 = scmp.eq.s32.totalorder %s20, 3
      %p59 = scmp.ne.s32.totalorder %s54, %s56
      %p60 = scmp.eq.s32.totalorder %s20, 0
      %p61 = por %p59, %p60
      %p62 = scmp.ne.s32.totalorder %s54, %s56
      %p63 = scmp.eq.s32.totalorder %s25, 3
      %p64 = por %p62, %p63
      %p65 = scmp.ne.s32.totalorder %s56, %s57
      %p66 = scmp.eq.s32.totalorder %s25, 0
      %p67 = por %p65, %p66
      %p68 = scmp.ne.s32.totalorder %s56, %s57
      %p69 = scmp.eq.s32.totalorder %s26, 3
      %p70 = por %p68, %p69
      %p72 = scmp.ne.s32.totalorder %s57, %s71
      %p73 = scmp.eq.s32.totalorder %s26, 0
      %p74 = por %p72, %p73
      %s76 = sadd.s32 %s75, 1
      %p79 = scmp.eq.s32.totalorder %s20, 3
      %p80 = scmp.ne.s32.totalorder %s75, %s77
      %p81 = scmp.eq.s32.totalorder %s20, 0
      %p82 = por %p80, %p81
      %p83 = scmp.ne.s32.totalorder %s75, %s77
      %p84 = scmp.eq.s32.totalorder %s25, 3
      %p85 = por %p83, %p84
      %p86 = scmp.ne.s32.totalorder %s77, %s78
      %p87 = scmp.eq.s32.totalorder %s25, 0
      %p88 = por %p86, %p87
      %p89 = scmp.ne.s32.totalorder %s77, %s78
      %p90 = scmp.eq.s32.totalorder %s26, 3
      %p91 = por %p89, %p90
      %p93 = scmp.ne.s32.totalorder %s78, %s92
      %p94 = scmp.eq.s32.totalorder %s26, 0
      %p95 = por %p93, %p94
      %s97 = sadd.s32 %s96, 1
      %p100 = scmp.eq.s32.totalorder %s20, 3
      %p101 = scmp.ne.s32.totalorder %s96, %s98
      %p102 = scmp.eq.s32.totalorder %s20, 0
      %p103 = por %p101, %p102
      %p104 = scmp.ne.s32.totalorder %s96, %s98
      %p105 = scmp.eq.s32.totalorder %s25, 3
      %p106 = por %p104, %p105
      %p107 = scmp.ne.s32.totalorder %s98, %s99
      %p108 = scmp.eq.s32.totalorder %s25, 0
      %p109 = por %p107, %p108
      %p110 = scmp.ne.s32.totalorder %s98, %s99
      %p111 = scmp.eq.s32.totalorder %s26, 3
      %p112 = por %p110, %p111
      %p114 = scmp.ne.s32.totalorder %s99, %s113
      %p115 = scmp.eq.s32.totalorder %s26, 0
      %p116 = por %p114, %p115
      %s118 = sadd.s32 %s117, 1
      %p121 = scmp.eq.s32.totalorder %s20, 3
      %p122 = scmp.ne.s32.totalorder %s117, %s119
      %p123 = scmp.eq.s32.totalorder %s20, 0
      %p124 = por %p122, %p123
      %p125 = scmp.ne.s32.totalorder %s117, %s119
      %p126 = scmp.eq.s32.totalorder %s25, 3
      %p127 = por %p125, %p126
      %p128 = scmp.ne.s32.totalorder %s119, %s120
      %p129 = scmp.eq.s32.totalorder %s25, 0
      %p130 = por %p128, %p129
      %p131 = scmp.ne.s32.totalorder %s119, %s120
      %p132 = scmp.eq.s32.totalorder %s26, 3
      %p133 = por %p131, %p132
      %p135 = scmp.ne.s32.totalorder %s120, %s134
      %p136 = scmp.eq.s32.totalorder %s26, 0
      %p137 = por %p135, %p136
      %s139 = sadd.s32 %s138, 1
      %p142 = scmp.eq.s32.totalorder %s20, 3
      %p143 = scmp.ne.s32.totalorder %s138, %s140
      %p144 = scmp.eq.s32.totalorder %s20, 0
      %p145 = por %p143, %p144
      %p146 = scmp.ne.s32.totalorder %s138, %s140
      %p147 = scmp.eq.s32.totalorder %s25, 3
      %p148 = por %p146, %p147
      %p149 = scmp.ne.s32.totalorder %s140, %s141
      %p150 = scmp.eq.s32.totalorder %s25, 0
      %p151 = por %p149, %p150
      %p152 = scmp.ne.s32.totalorder %s140, %s141
      %p153 = scmp.eq.s32.totalorder %s26, 3
      %p154 = por %p152, %p153
      %p156 = scmp.ne.s32.totalorder %s141, %s155
      %p157 = scmp.eq.s32.totalorder %s26, 0
      %p158 = por %p156, %p157
      %s160 = sadd.s32 %s159, 1
      %p163 = scmp.eq.s32.totalorder %s20, 3
      %p164 = scmp.ne.s32.totalorder %s159, %s161
      %p165 = scmp.eq.s32.totalorder %s20, 0
      %p166 = por %p164, %p165
      %p167 = scmp.ne.s32.totalorder %s159, %s161
      %p168 = scmp.eq.s32.totalorder %s25, 3
      %p169 = por %p167, %p168
      %p170 = scmp.ne.s32.totalorder %s161, %s162
      %p171 = scmp.eq.s32.totalorder %s25, 0
      %p172 = por %p170, %p171
      %p173 = scmp.ne.s32.totalorder %s161, %s162
      %p174 = scmp.eq.s32.totalorder %s26, 3
      %p175 = por %p173, %p174
      %p177 = scmp.ne.s32.totalorder %s162, %s176
      %p178 = scmp.eq.s32.totalorder %s26, 0
      %p179 = por %p177, %p178
      %s181 = sadd.s32 %s180, 1
      %p184 = scmp.eq.s32.totalorder %s20, 3
      %p185 = scmp.ne.s32.totalorder %s180, %s182
      %p186 = scmp.eq.s32.totalorder %s20, 0
      %p187 = por %p185, %p186
      %p188 = scmp.ne.s32.totalorder %s180, %s182
      %p189 = scmp.eq.s32.totalorder %s25, 3
      %p190 = por %p188, %p189
      %p191 = scmp.ne.s32.totalorder %s182, %s183
      %p192 = scmp.eq.s32.totalorder %s25, 0
      %p193 = por %p191, %p192
      %p194 = scmp.ne.s32.totalorder %s182, %s183
      %p195 = scmp.eq.s32.totalorder %s26, 3
      %p196 = por %p194, %p195
      %p198 = scmp.ne.s32.totalorder %s183, %s197
      %p199 = scmp.eq.s32.totalorder %s26, 0
      %p200 = por %p198, %p199
      %s202 = sadd.s32 %s201, 1
      %p205 = scmp.eq.s32.totalorder %s20, 3
      %p206 = scmp.ne.s32.totalorder %s201, %s203
      %p207 = scmp.eq.s32.totalorder %s20, 0
      %p208 = por %p206, %p207
      %p209 = scmp.ne.s32.totalorder %s201, %s203
      %p210 = scmp.eq.s32.totalorder %s25, 3
      %p211 = por %p209, %p210
      %p212 = scmp.ne.s32.totalorder %s203, %s204
      %p213 = scmp.eq.s32.totalorder %s25, 0
      %p214 = por %p212, %p213
      %p215 = scmp.ne.s32.totalorder %s203, %s204
      %p216 = scmp.eq.s32.totalorder %s26, 3
      %p217 = por %p215, %p216
      %p219 = scmp.ne.s32.totalorder %s204, %s218
      %p220 = scmp.eq.s32.totalorder %s26, 0
      %p221 = por %p219, %p220
      %s222 = ssub.s32 %s20, %s27
      %p223 = scmp.eq.s32.totalorder %s222, 0
      %s225 = sadd.s32 %s224, 1
      %s226 = scalar_select %p223, %s224, %s225
      %p229 = pneg %p223
      %p230 = scmp.eq.s32.totalorder %s20, 3
      %p231 = por %p229, %p230
      %p232 = scmp.ne.s32.totalorder %s224, %s227
      %p233 = scmp.eq.s32.totalorder %s20, 0
      %p234 = por %p232, %p233
      %p235 = scmp.ne.s32.totalorder %s224, %s227
      %p236 = scmp.eq.s32.totalorder %s25, 3
      %p237 = por %p235, %p236
      %p238 = scmp.ne.s32.totalorder %s227, %s228
      %p239 = scmp.eq.s32.totalorder %s25, 0
      %p240 = por %p238, %p239
      %p241 = scmp.ne.s32.totalorder %s227, %s228
      %p242 = scmp.eq.s32.totalorder %s26, 3
      %p243 = por %p241, %p242
      %p245 = scmp.ne.s32.totalorder %s228, %s244
      %p246 = scmp.eq.s32.totalorder %s26, 0
      %p247 = por %p245, %p246
      %p248 = scmp.le.s32.totalorder 1, %s20
      %p249 = scmp.lt.s32.totalorder %s20, 5
      %p250 = pnand %p248, %p249
      %p251 = pneg %p250
      // Predicated region
      $region9: #{tpu_custom_call.1} parent=5 // pred_check
        _
      $region10: #{tpu_custom_call.1} parent=5 // pred_check_branch
        %253 = sbr.rel (%p250) target = $region12
      $region11: #{tpu_custom_call.1} parent=5 // pred_region
        %s254 = ssub.s32 %s20, 1
        // Predicated region
        $region13: #{tpu_custom_call.1} parent=11 // pred_check
          %p255 = pneg %p67
        $region14: #{tpu_custom_call.1} parent=11 // pred_check_branch
          %257 = sbr.rel (%p255) target = $region16
        $region15: #{tpu_custom_call.1} parent=11 // pred_region
          %s259 = ssub.s32 512, 512
          %260 = vsyncadd [#allocation4], %s259
          %s261 = sshll.u32 [#allocation3], 4
          %s262 = int_to_ptr.vmem [resolvable:$true] %s261
          %267 = dma.hbm_to_vmem [thread:$0]  %s1, 512, %s262, [#allocation4], 128, 128, 8
        $region16: #{tpu_custom_call.1} parent=11 // pred_fallthru
          _
        // Predicated region
        $region17: #{tpu_custom_call.1} parent=11 // pred_check
          %p268 = pneg %p88
        $region18: #{tpu_custom_call.1} parent=11 // pred_check_branch
          %270 = sbr.rel (%p268) target = $region20
        $region19: #{tpu_custom_call.1} parent=11 // pred_region
          _
        $region20: #{tpu_custom_call.1} parent=11 // pred_fallthru
          _
        // Predicated region
        $region21: #{tpu_custom_call.1} parent=11 // pred_check
          %p271 = pneg %p109
        $region22: #{tpu_custom_call.1} parent=11 // pred_check_branch
          %273 = sbr.rel (%p271) target = $region24
        $region23: #{tpu_custom_call.1} parent=11 // pred_region
          %s275 = ssub.s32 128, 128
          %276 = vsyncadd [#allocation7], %s275
          %s278 = sshll.u32 [#allocation6], 4
          %s279 = int_to_ptr.vmem [resolvable:$true] %s278
          %281 = dma.hbm_to_vmem [thread:$0]  %s3, 128, %s279, [#allocation7]
        $region24: #{tpu_custom_call.1} parent=11 // pred_fallthru
          _
        // Predicated region
        $region25: #{tpu_custom_call.1} parent=11 // pred_check
          %p282 = pneg %p130
        $region26: #{tpu_custom_call.1} parent=11 // pred_check_branch
          %284 = sbr.rel (%p282) target = $region28
        $region27: #{tpu_custom_call.1} parent=11 // pred_region
          _
        $region28: #{tpu_custom_call.1} parent=11 // pred_fallthru
          _
        // Predicated region
        $region29: #{tpu_custom_call.1} parent=11 // pred_check
          %p285 = pneg %p151
        $region30: #{tpu_custom_call.1} parent=11 // pred_check_branch
          %287 = sbr.rel (%p285) target = $region32
        $region31: #{tpu_custom_call.1} parent=11 // pred_region
          _
        $region32: #{tpu_custom_call.1} parent=11 // pred_fallthru
          _
        // Predicated region
        $region33: #{tpu_custom_call.1} parent=11 // pred_check
          %p288 = pneg %p172
        $region34: #{tpu_custom_call.1} parent=11 // pred_check_branch
          %290 = sbr.rel (%p288) target = $region36
        $region35: #{tpu_custom_call.1} parent=11 // pred_region
          _
        $region36: #{tpu_custom_call.1} parent=11 // pred_fallthru
          _
        // Predicated region
        $region37: #{tpu_custom_call.1} parent=11 // pred_check
          %p291 = pneg %p193
        $region38: #{tpu_custom_call.1} parent=11 // pred_check_branch
          %293 = sbr.rel (%p291) target = $region40
        $region39: #{tpu_custom_call.1} parent=11 // pred_region
          _
        $region40: #{tpu_custom_call.1} parent=11 // pred_fallthru
          _
        // Predicated region
        $region41: #{tpu_custom_call.1} parent=11 // pred_check
          %p294 = pneg %p214
        $region42: #{tpu_custom_call.1} parent=11 // pred_check_branch
          %296 = sbr.rel (%p294) target = $region44
        $region43: #{tpu_custom_call.1} parent=11 // pred_region
          _
        $region44: #{tpu_custom_call.1} parent=11 // pred_fallthru
          _
      $region12: #{tpu_custom_call.1} parent=5 // pred_fallthru
        _
      %p297 = scmp.lt.s32.totalorder %s20, 4
      // Predicated region
      $region45: #{tpu_custom_call.1} parent=5 // pred_check
        %p298 = pneg %p297
      $region46: #{tpu_custom_call.1} parent=5 // pred_check_branch
        %300 = sbr.rel (%p298) target = $region48
      $region47: #{tpu_custom_call.1} parent=5 // pred_region
        // Predicated region
        $region49: #{tpu_custom_call.1} parent=47 // pred_check
          %p301 = pneg %p40
        $region50: #{tpu_custom_call.1} parent=47 // pred_check_branch
          %303 = sbr.rel (%p301) target = $region52
        $region51: #{tpu_custom_call.1} parent=47 // pred_region
          %s304 = sand.u32 %s30, 1
          %s305 = sand.u32 %s30, 1
          %s306 = smul.addr %s305, 64
          %s307 = scalar_lea.vmem [#allocation2], %s306
          %s308 = smul.addr %s20, 8
          %s309 = scalar_lea.vmem %s0, %s308
          // Predicated region
          $region53: #{tpu_custom_call.1} parent=51 // pred_check
            _
          $region54: #{tpu_custom_call.1} parent=51 // pred_check_branch
            %311 = sbr.rel (0) target = $region56
          $region55: #{tpu_custom_call.1} parent=51 // pred_region
            // Predicated region
            $region57: #{tpu_custom_call.1} parent=55 // pred_check
              _
            $region58: #{tpu_custom_call.1} parent=55 // pred_check_branch
              %313 = sbr.rel (0) target = $region60
            $region59: #{tpu_custom_call.1} parent=55 // pred_region
              // Predicated region
              $region72: #{tpu_custom_call.1} parent=59 // pred_check
                _
              $region73: #{tpu_custom_call.1} parent=59 // pred_check_branch
                %342 = sbr.rel (0) target = $region75
              $region74: #{tpu_custom_call.1} parent=59 // pred_region
                loop: start=0, step=1, limit=1
                $region76: #{tpu_custom_call.1} parent=74 // loop_pre_header
                  _
                $region77: #{tpu_custom_call.1} parent=74 // loop_header
                  %s344 = sphi 0, %s348
                  %p345 = scmp.ge.s32.totalorder %s344, 1
                  %s349 = sphi %s309, %s309
                  %s350 = sphi %s307, %s307
                $region78: #{tpu_custom_call.1} parent=74 // loop_header_branch
                  %347 = sbr.rel (%p345) target = $region82
                $region79: #{tpu_custom_call.1} parent=74 // loop_body
                  %v351 = vld [vmem:[%s349] sm:$0xff]
                  %352 = vst [vmem:[%s350] sm:$0xff] %v351
                  %v353 = vld [vmem:[%s349 + $0x20] sm:$0xff]
                  %354 = vst [vmem:[%s350 + $0x8] sm:$0xff] %v353
                  %v355 = vld [vmem:[%s349 + $0x40] sm:$0xff]
                  %356 = vst [vmem:[%s350 + $0x10] sm:$0xff] %v355
                  %v357 = vld [vmem:[%s349 + $0x60] sm:$0xff]
                  %358 = vst [vmem:[%s350 + $0x18] sm:$0xff] %v357
                  %v359 = vld [vmem:[%s349 + $0x80] sm:$0xff]
                  %360 = vst [vmem:[%s350 + $0x20] sm:$0xff] %v359
                  %v361 = vld [vmem:[%s349 + $0xa0] sm:$0xff]
                  %362 = vst [vmem:[%s350 + $0x28] sm:$0xff] %v361
                  %v363 = vld [vmem:[%s349 + $0xc0] sm:$0xff]
                  %364 = vst [vmem:[%s350 + $0x30] sm:$0xff] %v363
                  %v365 = vld [vmem:[%s349 + $0xe0] sm:$0xff]
                  %366 = vst [vmem:[%s350 + $0x38] sm:$0xff] %v365
                $region80: #{tpu_custom_call.1} parent=74 // loop_footer
                  %s348 = sadd.s32 1, %s344
                $region81: #{tpu_custom_call.1} parent=74 // loop_footer_branch
                  %343 = sbr.rel target = $region77
                $region82: #{tpu_custom_call.1} parent=74 // loop_exit
                  _
              $region75: #{tpu_custom_call.1} parent=59 // pred_fallthru
                _
              // Predicated region
              $region83: #{tpu_custom_call.1} parent=59 // pred_check
                _
              $region84: #{tpu_custom_call.1} parent=59 // pred_check_branch
                %368 = sbr.rel target = $region86
              $region85: #{tpu_custom_call.1} parent=59 // pred_region
                _
              $region86: #{tpu_custom_call.1} parent=59 // pred_fallthru
                _
            $region60: #{tpu_custom_call.1} parent=55 // pred_fallthru
              _
            // Predicated region
            $region61: #{tpu_custom_call.1} parent=55 // pred_check
              _
            $region62: #{tpu_custom_call.1} parent=55 // pred_check_branch
              %315 = sbr.rel target = $region64
            $region63: #{tpu_custom_call.1} parent=55 // pred_region
              loop: start=0, step=1, limit=1
              $region65: #{tpu_custom_call.1} parent=63 // loop_pre_header
                _
              $region66: #{tpu_custom_call.1} parent=63 // loop_header
                %s318 = sphi 0, %s322
                %p319 = scmp.ge.s32.totalorder %s318, 1
                %s323 = sphi %s309, %s309
                %s324 = sphi %s307, %s307
              $region67: #{tpu_custom_call.1} parent=63 // loop_header_branch
                %321 = sbr.rel (%p319) target = $region71
              $region68: #{tpu_custom_call.1} parent=63 // loop_body
                %v325 = vld [vmem:[%s323] sm:$0xff]
                %326 = vst [vmem:[%s324] sm:$0xff] %v325
                %v327 = vld [vmem:[%s323 + $0x20] sm:$0xff]
                %328 = vst [vmem:[%s324 + $0x8] sm:$0xff] %v327
                %v329 = vld [vmem:[%s323 + $0x40] sm:$0xff]
                %330 = vst [vmem:[%s324 + $0x10] sm:$0xff] %v329
                %v331 = vld [vmem:[%s323 + $0x60] sm:$0xff]
                %332 = vst [vmem:[%s324 + $0x18] sm:$0xff] %v331
                %v333 = vld [vmem:[%s323 + $0x80] sm:$0xff]
                %334 = vst [vmem:[%s324 + $0x20] sm:$0xff] %v333
                %v335 = vld [vmem:[%s323 + $0xa0] sm:$0xff]
                %336 = vst [vmem:[%s324 + $0x28] sm:$0xff] %v335
                %v337 = vld [vmem:[%s323 + $0xc0] sm:$0xff]
                %338 = vst [vmem:[%s324 + $0x30] sm:$0xff] %v337
                %v339 = vld [vmem:[%s323 + $0xe0] sm:$0xff]
                %340 = vst [vmem:[%s324 + $0x38] sm:$0xff] %v339
              $region69: #{tpu_custom_call.1} parent=63 // loop_footer
                %s322 = sadd.s32 1, %s318
              $region70: #{tpu_custom_call.1} parent=63 // loop_footer_branch
                %317 = sbr.rel target = $region66
              $region71: #{tpu_custom_call.1} parent=63 // loop_exit
                _
            $region64: #{tpu_custom_call.1} parent=55 // pred_fallthru
              _
          $region56: #{tpu_custom_call.1} parent=51 // pred_fallthru
            _
          %369 = vnop
        $region52: #{tpu_custom_call.1} parent=47 // pred_fallthru
          _
      $region48: #{tpu_custom_call.1} parent=5 // pred_fallthru
        _
      %p370 = scmp.le.s32.totalorder 1, %s20
      %p371 = scmp.lt.s32.totalorder %s20, 5
      %p372 = pnand %p370, %p371
      %p373 = pneg %p372
      // Predicated region
      $region87: #{tpu_custom_call.1} parent=5 // pred_check
        _
      $region88: #{tpu_custom_call.1} parent=5 // pred_check_branch
        %375 = sbr.rel (%p372) target = $region90
      $region89: #{tpu_custom_call.1} parent=5 // pred_region
        %s376 = ssub.s32 %s20, 1
        %s377 = sand.u32 %s33, 1
        %s378 = sand.u32 %s33, 1
        %s379 = smul.addr %s378, 64
        %s380 = scalar_lea.vmem [#allocation2], %s379
        // Predicated region
        $region91: #{tpu_custom_call.1} parent=89 // pred_check
          %p381 = pneg %p46
        $region92: #{tpu_custom_call.1} parent=89 // pred_check_branch
          %383 = sbr.rel (%p381) target = $region94
        $region93: #{tpu_custom_call.1} parent=89 // pred_region
          _
        $region94: #{tpu_custom_call.1} parent=89 // pred_fallthru
          _
        // Predicated region
        $region95: #{tpu_custom_call.1} parent=89 // pred_check
          %p384 = pneg %p67
        $region96: #{tpu_custom_call.1} parent=89 // pred_check_branch
          %386 = sbr.rel (%p384) target = $region98
        $region97: #{tpu_custom_call.1} parent=89 // pred_region
          %387 = dma.done [#allocation4], 512
        $region98: #{tpu_custom_call.1} parent=89 // pred_fallthru
          _
        // Predicated region
        $region99: #{tpu_custom_call.1} parent=89 // pred_check
          %p388 = pneg %p109
        $region100: #{tpu_custom_call.1} parent=89 // pred_check_branch
          %390 = sbr.rel (%p388) target = $region102
        $region101: #{tpu_custom_call.1} parent=89 // pred_region
          %391 = dma.done [#allocation7], 128
        $region102: #{tpu_custom_call.1} parent=89 // pred_fallthru
          _
        %s392 = sand.u32 %s33, 1
        %s393 = sand.u32 %s33, 1
        %s394 = smul.addr %s393, 64
        %s395 = scalar_lea.vmem [#allocation2], %s394
        %p396 = pneg %p46
        %p397 = pneg %p43
        %p398 = pneg %p67
        %p399 = pneg %p64
        %p400 = pneg %p88
        %p401 = pneg %p85
        %p402 = pneg %p109
        %p403 = pneg %p106
        %p404 = pneg %p130
        %p405 = pneg %p127
        %p406 = pneg %p151
        %p407 = pneg %p148
        %p408 = pneg %p172
        %p409 = pneg %p169
        %p410 = pneg %p193
        %p411 = pneg %p190
        %p412 = pneg %p214
        %p413 = pneg %p211
        %p414 = pneg %p240
        %p415 = pneg %p237
        %s416 = sand.u32 %s227, 1
        %s417 = scalar_lea.sflag [#allocation5], %s416
        %s418 = sand.u32 %s227, 1
        %s419 = smul.addr %s418, 64
        %s420 = scalar_lea.vmem [#allocation8], %s419
        %v421 = vld [vmem:[%s380] sm:$0xff]
        %v422 = vld [vmem:[%s380 + $0x8] sm:$0xff]
        %v423 = vld [vmem:[%s380 + $0x10] sm:$0xff]
        %v424 = vld [vmem:[%s380 + $0x18] sm:$0xff]
        %v425 = vld [vmem:[%s380 + $0x20] sm:$0xff]
        %v426 = vld [vmem:[%s380 + $0x28] sm:$0xff]
        %v427 = vld [vmem:[%s380 + $0x30] sm:$0xff]
        %v428 = vld [vmem:[%s380 + $0x38] sm:$0xff]
        %v429 = vld [vmem:[#allocation3] sm:$0xff]
        %v430 = vld [vmem:[#allocation3 + $0x8] sm:$0xff]
        %v431 = vld [vmem:[#allocation3 + $0x10] sm:$0xff]
        %v432 = vld [vmem:[#allocation3 + $0x18] sm:$0xff]
        %v433 = vld [vmem:[%s2] sm:$0xff]
        %v434 = vld [vmem:[%s2 + $0x8] sm:$0xff]
        %v435 = vld [vmem:[%s2 + $0x10] sm:$0xff]
        %v436 = vld [vmem:[%s2 + $0x18] sm:$0xff]
        %438 = vset.pattern.permute.xlu0 0
        %439 = vperm.xlu0 %438, %v433
        %v440 = vpop.permute.xlu0 %439
        %443 = vset.pattern.permute.xlu0 0
        %444 = vperm.xlu0 %443, %v434
        %v445 = vpop.permute.xlu0 %444
        %448 = vset.pattern.permute.xlu0 0
        %449 = vperm.xlu0 %448, %v435
        %v450 = vpop.permute.xlu0 %449
        %453 = vset.pattern.permute.xlu0 0
        %454 = vperm.xlu0 %453, %v436
        %v455 = vpop.permute.xlu0 %454
        %vm457 = vcmask 523264
        %v459 = vsel %vm457, %v429, 0
        %v462 = vsel %vm457, %v430, 0
        %v465 = vsel %vm457, %v431, 0
        %v468 = vsel %vm457, %v432, 0
        %470 = vmatprep.subr.mxu0 0.0
        %471 = vmatpush1.msra.mxu0 %v421
        %472 = vmatprep.subr.mxu0 0.0
        %473 = vmatpush1.msra.mxu0 %v422
        %474 = vmatprep.subr.mxu0 0.0
        %475 = vmatpush1.msra.mxu0 %v423
        %476 = vmatprep.subr.mxu0 0.0
        %477 = vmatpush1.msra.mxu0 %v424
        %478 = vmatprep.subr.mxu0 0.0
        %479 = vmatpush1.msra.mxu0 %v425
        %480 = vmatprep.subr.mxu0 0.0
        %481 = vmatpush1.msra.mxu0 %v426
        %482 = vmatprep.subr.mxu0 0.0
        %483 = vmatpush1.msra.mxu0 %v427
        %484 = vmatprep.subr.mxu0 0.0
        %485 = vmatpush1.msra.mxu0 %v428
        %486 = vmatprep.subr.mxu0 0.0
        %487 = vmatpush1.msra.mxu0 0.0
        %488 = vmatprep.subr.mxu0 0.0
        %489 = vmatpush1.msra.mxu0 0.0
        %490 = vmatprep.subr.mxu0 0.0
        %491 = vmatpush1.msra.mxu0 0.0
        %492 = vmatprep.subr.mxu0 0.0
        %493 = vmatpush1.msra.mxu0 0.0
        %494 = vmatprep.subr.mxu0 0.0
        %495 = vmatpush1.msra.mxu0 0.0
        %496 = vmatprep.subr.mxu0 0.0
        %497 = vmatpush1.msra.mxu0 0.0
        %498 = vmatprep.subr.mxu0 0.0
        %499 = vmatpush1.msra.mxu0 0.0
        %500 = vmatprep.subr.mxu0 0.0
        %501 = vmatpush1.msra.mxu0 0.0
        %502 = vmatprep.subr.mxu0 0.0
        %503 = vmatpush1.msra.mxu0 0.0
        %504 = vmatprep.subr.mxu0 0.0
        %505 = vmatpush1.msra.mxu0 0.0
        %506 = vmatprep.subr.mxu0 0.0
        %507 = vmatpush1.msra.mxu0 0.0
        %508 = vmatprep.subr.mxu0 0.0
        %509 = vmatpush1.msra.mxu0 0.0
        %510 = vmatprep.subr.mxu0 0.0
        %511 = vmatpush1.msra.mxu0 0.0
        %512 = vmatprep.subr.mxu0 0.0
        %513 = vmatpush1.msra.mxu0 0.0
        %514 = vmatprep.subr.mxu0 0.0
        %515 = vmatpush1.msra.mxu0 0.0
        %516 = vmatprep.subr.mxu0 0.0
        %517 = vmatpush1.msra.mxu0 0.0
        %518 = vmatprep.subr.mxu0 0.0
        %519 = vmatpush1.msra.mxu0 0.0
        %520 = vmatprep.subr.mxu0 0.0
        %521 = vmatpush1.msra.mxu0 0.0
        %522 = vmatprep.subr.mxu0 0.0
        %523 = vmatpush1.msra.mxu0 0.0
        %524 = vmatprep.subr.mxu0 0.0
        %525 = vmatpush1.msra.mxu0 0.0
        %526 = vmatprep.subr.mxu0 0.0
        %527 = vmatpush1.msra.mxu0 0.0
        %528 = vmatprep.subr.mxu0 0.0
        %529 = vmatpush1.msra.mxu0 0.0
        %530 = vmatprep.subr.mxu0 0.0
        %531 = vmatpush1.msra.mxu0 0.0
        %532 = vmatprep.subr.mxu0 0.0
        %533 = vmatpush1.msra.mxu0 0.0
        %534 = vmatprep.mubr.f32.mxu0 0.0
        %535 = vmatmul.mubr.f32.gmra.mrb[0].mxu0 %v459
        %v536 = vpop.f32.mrb[0].mxu0
        %v537 = vadd.f32 %v440, %v536
        %v538 = vpop.f32.mrb[0].mxu0
        %539 = vmatprep.mubr.f32.mxu0 0.0
        %540 = vmatmul.mubr.f32.gmra.mrb[0].mxu0 %v462
        %v541 = vpop.f32.mrb[0].mxu0
        %v542 = vadd.f32 %v445, %v541
        %v543 = vpop.f32.mrb[0].mxu0
        %544 = vmatprep.mubr.f32.mxu0 0.0
        %545 = vmatmul.mubr.f32.gmra.mrb[0].mxu0 %v465
        %v546 = vpop.f32.mrb[0].mxu0
        %v547 = vadd.f32 %v450, %v546
        %v548 = vpop.f32.mrb[0].mxu0
        %549 = vmatprep.mubr.f32.mxu0 0.0
        %550 = vmatmul.mubr.f32.gmra.mrb[0].mxu0 %v468
        %v551 = vpop.f32.mrb[0].mxu0
        %v552 = vadd.f32 %v455, %v551
        %v553 = vpop.f32.mrb[0].mxu0
        %554 = vdwg.mxu0
        %v555 = vmax.f32 %v537, 0.0
        %v556 = vmax.f32 %v542, 0.0
        %v557 = vmax.f32 %v547, 0.0
        %v558 = vmax.f32 %v552, 0.0
        %v559 = vld [vmem:[#allocation6] sm:$0xff]
        %v560 = vld [vmem:[%s4] sm:$0xff]
        %562 = vset.pattern.permute.xlu0 0
        %563 = vperm.xlu0 %562, %v560
        %v564 = vpop.permute.xlu0 %563
        %vm566 = vcmask 261120
        %v568 = vsel %vm566, %v559, 0
        %570 = vmatprep.subr.mxu0 0.0
        %571 = vmatpush1.msra.mxu0 %v555
        %572 = vmatprep.subr.mxu0 0.0
        %573 = vmatpush1.msra.mxu0 %v556
        %574 = vmatprep.subr.mxu0 0.0
        %575 = vmatpush1.msra.mxu0 %v557
        %576 = vmatprep.subr.mxu0 0.0
        %577 = vmatpush1.msra.mxu0 %v558
        %578 = vmatprep.subr.mxu0 0.0
        %579 = vmatpush1.msra.mxu0 0.0
        %580 = vmatprep.subr.mxu0 0.0
        %581 = vmatpush1.msra.mxu0 0.0
        %582 = vmatprep.subr.mxu0 0.0
        %583 = vmatpush1.msra.mxu0 0.0
        %584 = vmatprep.subr.mxu0 0.0
        %585 = vmatpush1.msra.mxu0 0.0
        %586 = vmatprep.subr.mxu0 0.0
        %587 = vmatpush1.msra.mxu0 0.0
        %588 = vmatprep.subr.mxu0 0.0
        %589 = vmatpush1.msra.mxu0 0.0
        %590 = vmatprep.subr.mxu0 0.0
        %591 = vmatpush1.msra.mxu0 0.0
        %592 = vmatprep.subr.mxu0 0.0
        %593 = vmatpush1.msra.mxu0 0.0
        %594 = vmatprep.subr.mxu0 0.0
        %595 = vmatpush1.msra.mxu0 0.0
        %596 = vmatprep.subr.mxu0 0.0
        %597 = vmatpush1.msra.mxu0 0.0
        %598 = vmatprep.subr.mxu0 0.0
        %599 = vmatpush1.msra.mxu0 0.0
        %600 = vmatprep.subr.mxu0 0.0
        %601 = vmatpush1.msra.mxu0 0.0
        %602 = vmatprep.subr.mxu0 0.0
        %603 = vmatpush1.msra.mxu0 0.0
        %604 = vmatprep.subr.mxu0 0.0
        %605 = vmatpush1.msra.mxu0 0.0
        %606 = vmatprep.subr.mxu0 0.0
        %607 = vmatpush1.msra.mxu0 0.0
        %608 = vmatprep.subr.mxu0 0.0
        %609 = vmatpush1.msra.mxu0 0.0
        %610 = vmatprep.subr.mxu0 0.0
        %611 = vmatpush1.msra.mxu0 0.0
        %612 = vmatprep.subr.mxu0 0.0
        %613 = vmatpush1.msra.mxu0 0.0
        %614 = vmatprep.subr.mxu0 0.0
        %615 = vmatpush1.msra.mxu0 0.0
        %616 = vmatprep.subr.mxu0 0.0
        %617 = vmatpush1.msra.mxu0 0.0
        %618 = vmatprep.subr.mxu0 0.0
        %619 = vmatpush1.msra.mxu0 0.0
        %620 = vmatprep.subr.mxu0 0.0
        %621 = vmatpush1.msra.mxu0 0.0
        %622 = vmatprep.subr.mxu0 0.0
        %623 = vmatpush1.msra.mxu0 0.0
        %624 = vmatprep.subr.mxu0 0.0
        %625 = vmatpush1.msra.mxu0 0.0
        %626 = vmatprep.subr.mxu0 0.0
        %627 = vmatpush1.msra.mxu0 0.0
        %628 = vmatprep.subr.mxu0 0.0
        %629 = vmatpush1.msra.mxu0 0.0
        %630 = vmatprep.subr.mxu0 0.0
        %631 = vmatpush1.msra.mxu0 0.0
        %632 = vmatprep.subr.mxu0 0.0
        %633 = vmatpush1.msra.mxu0 0.0
        %634 = vmatprep.mubr.f32.mxu0 0.0
        %635 = vmatmul.mubr.f32.gmra.mrb[0].mxu0 %v568
        %v636 = vpop.f32.mrb[0].mxu0
        %v637 = vadd.f32 %v564, %v636
        %v638 = vpop.f32.mrb[0].mxu0
        %639 = vdwg.mxu0
        %v640 = vmax.f32 %v637, 0.0
        %v641 = vld [vmem:[%s5] sm:$0xff]
        %v642 = vld [vmem:[%s5 + $0x8] sm:$0xff]
        %v643 = vld [vmem:[%s5 + $0x10] sm:$0xff]
        %v644 = vld [vmem:[%s5 + $0x18] sm:$0xff]
        %v645 = vld [vmem:[%s6] sm:$0xff]
        %v646 = vld [vmem:[%s6 + $0x8] sm:$0xff]
        %v647 = vld [vmem:[%s6 + $0x10] sm:$0xff]
        %v648 = vld [vmem:[%s6 + $0x18] sm:$0xff]
        %650 = vset.pattern.permute.xlu0 0
        %651 = vperm.xlu0 %650, %v645
        %v652 = vpop.permute.xlu0 %651
        %655 = vset.pattern.permute.xlu0 0
        %656 = vperm.xlu0 %655, %v646
        %v657 = vpop.permute.xlu0 %656
        %660 = vset.pattern.permute.xlu0 0
        %661 = vperm.xlu0 %660, %v647
        %v662 = vpop.permute.xlu0 %661
        %665 = vset.pattern.permute.xlu0 0
        %666 = vperm.xlu0 %665, %v648
        %v667 = vpop.permute.xlu0 %666
        %vm669 = vcmask 64512
        %v671 = vsel %vm669, %v641, 0
        %v674 = vsel %vm669, %v642, 0
        %v677 = vsel %vm669, %v643, 0
        %v680 = vsel %vm669, %v644, 0
        %682 = vmatprep.subr.mxu0 0.0
        %683 = vmatpush1.msra.mxu0 %v640
        %684 = vmatprep.subr.mxu0 0.0
        %685 = vmatpush1.msra.mxu0 0.0
        %686 = vmatprep.subr.mxu0 0.0
        %687 = vmatpush1.msra.mxu0 0.0
        %688 = vmatprep.subr.mxu0 0.0
        %689 = vmatpush1.msra.mxu0 0.0
        %690 = vmatprep.subr.mxu0 0.0
        %691 = vmatpush1.msra.mxu0 0.0
        %692 = vmatprep.subr.mxu0 0.0
        %693 = vmatpush1.msra.mxu0 0.0
        %694 = vmatprep.subr.mxu0 0.0
        %695 = vmatpush1.msra.mxu0 0.0
        %696 = vmatprep.subr.mxu0 0.0
        %697 = vmatpush1.msra.mxu0 0.0
        %698 = vmatprep.subr.mxu0 0.0
        %699 = vmatpush1.msra.mxu0 0.0
        %700 = vmatprep.subr.mxu0 0.0
        %701 = vmatpush1.msra.mxu0 0.0
        %702 = vmatprep.subr.mxu0 0.0
        %703 = vmatpush1.msra.mxu0 0.0
        %704 = vmatprep.subr.mxu0 0.0
        %705 = vmatpush1.msra.mxu0 0.0
        %706 = vmatprep.subr.mxu0 0.0
        %707 = vmatpush1.msra.mxu0 0.0
        %708 = vmatprep.subr.mxu0 0.0
        %709 = vmatpush1.msra.mxu0 0.0
        %710 = vmatprep.subr.mxu0 0.0
        %711 = vmatpush1.msra.mxu0 0.0
        %712 = vmatprep.subr.mxu0 0.0
        %713 = vmatpush1.msra.mxu0 0.0
        %714 = vmatprep.subr.mxu0 0.0
        %715 = vmatpush1.msra.mxu0 0.0
        %716 = vmatprep.subr.mxu0 0.0
        %717 = vmatpush1.msra.mxu0 0.0
        %718 = vmatprep.subr.mxu0 0.0
        %719 = vmatpush1.msra.mxu0 0.0
        %720 = vmatprep.subr.mxu0 0.0
        %721 = vmatpush1.msra.mxu0 0.0
        %722 = vmatprep.subr.mxu0 0.0
        %723 = vmatpush1.msra.mxu0 0.0
        %724 = vmatprep.subr.mxu0 0.0
        %725 = vmatpush1.msra.mxu0 0.0
        %726 = vmatprep.subr.mxu0 0.0
        %727 = vmatpush1.msra.mxu0 0.0
        %728 = vmatprep.subr.mxu0 0.0
        %729 = vmatpush1.msra.mxu0 0.0
        %730 = vmatprep.subr.mxu0 0.0
        %731 = vmatpush1.msra.mxu0 0.0
        %732 = vmatprep.subr.mxu0 0.0
        %733 = vmatpush1.msra.mxu0 0.0
        %734 = vmatprep.subr.mxu0 0.0
        %735 = vmatpush1.msra.mxu0 0.0
        %736 = vmatprep.subr.mxu0 0.0
        %737 = vmatpush1.msra.mxu0 0.0
        %738 = vmatprep.subr.mxu0 0.0
        %739 = vmatpush1.msra.mxu0 0.0
        %740 = vmatprep.subr.mxu0 0.0
        %741 = vmatpush1.msra.mxu0 0.0
        %742 = vmatprep.subr.mxu0 0.0
        %743 = vmatpush1.msra.mxu0 0.0
        %744 = vmatprep.subr.mxu0 0.0
        %745 = vmatpush1.msra.mxu0 0.0
        %746 = vmatprep.mubr.f32.mxu0 0.0
        %747 = vmatmul.mubr.f32.gmra.mrb[0].mxu0 %v671
        %v748 = vpop.f32.mrb[0].mxu0
        %v749 = vadd.f32 %v652, %v748
        %v750 = vpop.f32.mrb[0].mxu0
        %751 = vmatprep.mubr.f32.mxu0 0.0
        %752 = vmatmul.mubr.f32.gmra.mrb[0].mxu0 %v674
        %v753 = vpop.f32.mrb[0].mxu0
        %v754 = vadd.f32 %v657, %v753
        %v755 = vpop.f32.mrb[0].mxu0
        %756 = vmatprep.mubr.f32.mxu0 0.0
        %757 = vmatmul.mubr.f32.gmra.mrb[0].mxu0 %v677
        %v758 = vpop.f32.mrb[0].mxu0
        %v759 = vadd.f32 %v662, %v758
        %v760 = vpop.f32.mrb[0].mxu0
        %761 = vmatprep.mubr.f32.mxu0 0.0
        %762 = vmatmul.mubr.f32.gmra.mrb[0].mxu0 %v680
        %v763 = vpop.f32.mrb[0].mxu0
        %v764 = vadd.f32 %v667, %v763
        %v765 = vpop.f32.mrb[0].mxu0
        %766 = vdwg.mxu0
        %v767 = vmax.f32 %v749, 0.0
        %v768 = vmax.f32 %v754, 0.0
        %v769 = vmax.f32 %v759, 0.0
        %v770 = vmax.f32 %v764, 0.0
        %v771 = vld [vmem:[%s7] sm:$0xff]
        %v772 = vld [vmem:[%s7 + $0x8] sm:$0xff]
        %v773 = vld [vmem:[%s7 + $0x10] sm:$0xff]
        %v774 = vld [vmem:[%s7 + $0x18] sm:$0xff]
        %v775 = vld [vmem:[%s7 + $0x20] sm:$0xff]
        %v776 = vld [vmem:[%s7 + $0x28] sm:$0xff]
        %v777 = vld [vmem:[%s7 + $0x30] sm:$0xff]
        %v778 = vld [vmem:[%s7 + $0x38] sm:$0xff]
        %v779 = vld [vmem:[%s8] sm:$0xff]
        %v780 = vld [vmem:[%s8 + $0x8] sm:$0xff]
        %v781 = vld [vmem:[%s8 + $0x10] sm:$0xff]
        %v782 = vld [vmem:[%s8 + $0x18] sm:$0xff]
        %v783 = vld [vmem:[%s8 + $0x20] sm:$0xff]
        %v784 = vld [vmem:[%s8 + $0x28] sm:$0xff]
        %v785 = vld [vmem:[%s8 + $0x30] sm:$0xff]
        %v786 = vld [vmem:[%s8 + $0x38] sm:$0xff]
        %788 = vset.pattern.permute.xlu0 0
        %789 = vperm.xlu0 %788, %v779
        %v790 = vpop.permute.xlu0 %789
        %793 = vset.pattern.permute.xlu0 0
        %794 = vperm.xlu0 %793, %v780
        %v795 = vpop.permute.xlu0 %794
        %798 = vset.pattern.permute.xlu0 0
        %799 = vperm.xlu0 %798, %v781
        %v800 = vpop.permute.xlu0 %799
        %803 = vset.pattern.permute.xlu0 0
        %804 = vperm.xlu0 %803, %v782
        %v805 = vpop.permute.xlu0 %804
        %808 = vset.pattern.permute.xlu0 0
        %809 = vperm.xlu0 %808, %v783
        %v810 = vpop.permute.xlu0 %809
        %813 = vset.pattern.permute.xlu0 0
        %814 = vperm.xlu0 %813, %v784
        %v815 = vpop.permute.xlu0 %814
        %818 = vset.pattern.permute.xlu0 0
        %819 = vperm.xlu0 %818, %v785
        %v820 = vpop.permute.xlu0 %819
        %823 = vset.pattern.permute.xlu0 0
        %824 = vperm.xlu0 %823, %v786
        %v825 = vpop.permute.xlu0 %824
        %v828 = vsel %vm566, %v771, 0
        %v831 = vsel %vm566, %v772, 0
        %v834 = vsel %vm566, %v773, 0
        %v837 = vsel %vm566, %v774, 0
        %v840 = vsel %vm566, %v775, 0
        %v843 = vsel %vm566, %v776, 0
        %v846 = vsel %vm566, %v777, 0
        %v849 = vsel %vm566, %v778, 0
        %851 = vmatprep.subr.mxu0 0.0
        %852 = vmatpush1.msra.mxu0 %v767
        %853 = vmatprep.subr.mxu0 0.0
        %854 = vmatpush1.msra.mxu0 %v768
        %855 = vmatprep.subr.mxu0 0.0
        %856 = vmatpush1.msra.mxu0 %v769
        %857 = vmatprep.subr.mxu0 0.0
        %858 = vmatpush1.msra.mxu0 %v770
        %859 = vmatprep.subr.mxu0 0.0
        %860 = vmatpush1.msra.mxu0 0.0
        %861 = vmatprep.subr.mxu0 0.0
        %862 = vmatpush1.msra.mxu0 0.0
        %863 = vmatprep.subr.mxu0 0.0
        %864 = vmatpush1.msra.mxu0 0.0
        %865 = vmatprep.subr.mxu0 0.0
        %866 = vmatpush1.msra.mxu0 0.0
        %867 = vmatprep.subr.mxu0 0.0
        %868 = vmatpush1.msra.mxu0 0.0
        %869 = vmatprep.subr.mxu0 0.0
        %870 = vmatpush1.msra.mxu0 0.0
        %871 = vmatprep.subr.mxu0 0.0
        %872 = vmatpush1.msra.mxu0 0.0
        %873 = vmatprep.subr.mxu0 0.0
        %874 = vmatpush1.msra.mxu0 0.0
        %875 = vmatprep.subr.mxu0 0.0
        %876 = vmatpush1.msra.mxu0 0.0
        %877 = vmatprep.subr.mxu0 0.0
        %878 = vmatpush1.msra.mxu0 0.0
        %879 = vmatprep.subr.mxu0 0.0
        %880 = vmatpush1.msra.mxu0 0.0
        %881 = vmatprep.subr.mxu0 0.0
        %882 = vmatpush1.msra.mxu0 0.0
        %883 = vmatprep.subr.mxu0 0.0
        %884 = vmatpush1.msra.mxu0 0.0
        %885 = vmatprep.subr.mxu0 0.0
        %886 = vmatpush1.msra.mxu0 0.0
        %887 = vmatprep.subr.mxu0 0.0
        %888 = vmatpush1.msra.mxu0 0.0
        %889 = vmatprep.subr.mxu0 0.0
        %890 = vmatpush1.msra.mxu0 0.0
        %891 = vmatprep.subr.mxu0 0.0
        %892 = vmatpush1.msra.mxu0 0.0
        %893 = vmatprep.subr.mxu0 0.0
        %894 = vmatpush1.msra.mxu0 0.0
        %895 = vmatprep.subr.mxu0 0.0
        %896 = vmatpush1.msra.mxu0 0.0
        %897 = vmatprep.subr.mxu0 0.0
        %898 = vmatpush1.msra.mxu0 0.0
        %899 = vmatprep.subr.mxu0 0.0
        %900 = vmatpush1.msra.mxu0 0.0
        %901 = vmatprep.subr.mxu0 0.0
        %902 = vmatpush1.msra.mxu0 0.0
        %903 = vmatprep.subr.mxu0 0.0
        %904 = vmatpush1.msra.mxu0 0.0
        %905 = vmatprep.subr.mxu0 0.0
        %906 = vmatpush1.msra.mxu0 0.0
        %907 = vmatprep.subr.mxu0 0.0
        %908 = vmatpush1.msra.mxu0 0.0
        %909 = vmatprep.subr.mxu0 0.0
        %910 = vmatpush1.msra.mxu0 0.0
        %911 = vmatprep.subr.mxu0 0.0
        %912 = vmatpush1.msra.mxu0 0.0
        %913 = vmatprep.subr.mxu0 0.0
        %914 = vmatpush1.msra.mxu0 0.0
        %915 = vmatprep.mubr.f32.mxu0 0.0
        %916 = vmatmul.mubr.f32.gmra.mrb[0].mxu0 %v828
        %v917 = vpop.f32.mrb[0].mxu0
        %v918 = vadd.f32 %v790, %v917
        %v919 = vpop.f32.mrb[0].mxu0
        %920 = vmatprep.mubr.f32.mxu0 0.0
        %921 = vmatmul.mubr.f32.gmra.mrb[0].mxu0 %v831
        %v922 = vpop.f32.mrb[0].mxu0
        %v923 = vadd.f32 %v795, %v922
        %v924 = vpop.f32.mrb[0].mxu0
        %925 = vmatprep.mubr.f32.mxu0 0.0
        %926 = vmatmul.mubr.f32.gmra.mrb[0].mxu0 %v834
        %v927 = vpop.f32.mrb[0].mxu0
        %v928 = vadd.f32 %v800, %v927
        %v929 = vpop.f32.mrb[0].mxu0
        %930 = vmatprep.mubr.f32.mxu0 0.0
        %931 = vmatmul.mubr.f32.gmra.mrb[0].mxu0 %v837
        %v932 = vpop.f32.mrb[0].mxu0
        %v933 = vadd.f32 %v805, %v932
        %v934 = vpop.f32.mrb[0].mxu0
        %935 = vmatprep.mubr.f32.mxu0 0.0
        %936 = vmatmul.mubr.f32.gmra.mrb[0].mxu0 %v840
        %v937 = vpop.f32.mrb[0].mxu0
        %v938 = vadd.f32 %v810, %v937
        %v939 = vpop.f32.mrb[0].mxu0
        %940 = vmatprep.mubr.f32.mxu0 0.0
        %941 = vmatmul.mubr.f32.gmra.mrb[0].mxu0 %v843
        %v942 = vpop.f32.mrb[0].mxu0
        %v943 = vadd.f32 %v815, %v942
        %v944 = vpop.f32.mrb[0].mxu0
        %945 = vmatprep.mubr.f32.mxu0 0.0
        %946 = vmatmul.mubr.f32.gmra.mrb[0].mxu0 %v846
        %v947 = vpop.f32.mrb[0].mxu0
        %v948 = vadd.f32 %v820, %v947
        %v949 = vpop.f32.mrb[0].mxu0
        %950 = vmatprep.mubr.f32.mxu0 0.0
        %951 = vmatmul.mubr.f32.gmra.mrb[0].mxu0 %v849
        %v952 = vpop.f32.mrb[0].mxu0
        %v953 = vadd.f32 %v825, %v952
        %v954 = vpop.f32.mrb[0].mxu0
        %955 = vdwg.mxu0
        %956 = vst [vmem:[%s420] sm:$0xff] %v918
        %957 = vst [vmem:[%s420 + $0x8] sm:$0xff] %v923
        %958 = vst [vmem:[%s420 + $0x10] sm:$0xff] %v928
        %959 = vst [vmem:[%s420 + $0x18] sm:$0xff] %v933
        %960 = vst [vmem:[%s420 + $0x20] sm:$0xff] %v938
        %961 = vst [vmem:[%s420 + $0x28] sm:$0xff] %v943
        %962 = vst [vmem:[%s420 + $0x30] sm:$0xff] %v948
        %963 = vst [vmem:[%s420 + $0x38] sm:$0xff] %v953
        %s964 = sand.u32 %s227, 1
        %s965 = scalar_lea.sflag [#allocation5], %s964
        %s966 = sand.u32 %s227, 1
        %s967 = smul.addr %s966, 64
        %s968 = scalar_lea.vmem [#allocation8], %s967
        // Predicated region
        $region103: #{tpu_custom_call.1} parent=89 // pred_check
          %p969 = pneg %p237
        $region104: #{tpu_custom_call.1} parent=89 // pred_check_branch
          %971 = sbr.rel (%p969) target = $region106
        $region105: #{tpu_custom_call.1} parent=89 // pred_region
          %s973 = ssub.s32 1024, 1024
          %974 = vsyncadd %s965, %s973
          %s975 = smul.addr %s25, 128
          %s976 = scalar_lea.hbm %s9, %s975
          %s977 = sshll.u32 %s968, 4
          %s978 = int_to_ptr.vmem [resolvable:$true] %s977
          %983 = dma.vmem_to_hbm [thread:$0]  %s978, 1024, %s976, %s965, 128, 512, 8
        $region106: #{tpu_custom_call.1} parent=89 // pred_fallthru
          _
      $region90: #{tpu_custom_call.1} parent=5 // pred_fallthru
        _
      %p984 = scmp.le.s32.totalorder 2, %s20
      // Predicated region
      $region107: #{tpu_custom_call.1} parent=5 // pred_check
        %p985 = pneg %p984
      $region108: #{tpu_custom_call.1} parent=5 // pred_check_branch
        %987 = sbr.rel (%p985) target = $region110
      $region109: #{tpu_custom_call.1} parent=5 // pred_region
        %s988 = ssub.s32 %s20, 2
        // Predicated region
        $region111: #{tpu_custom_call.1} parent=109 // pred_check
          %p989 = pneg %p243
        $region112: #{tpu_custom_call.1} parent=109 // pred_check_branch
          %991 = sbr.rel (%p989) target = $region114
        $region113: #{tpu_custom_call.1} parent=109 // pred_region
          %s992 = sand.u32 %s228, 1
          %s993 = scalar_lea.sflag [#allocation5], %s992
          %s994 = sand.u32 %s228, 1
          %s995 = smul.addr %s994, 64
          %s996 = scalar_lea.vmem [#allocation8], %s995
          %997 = dma.done %s993, 1024
        $region114: #{tpu_custom_call.1} parent=109 // pred_fallthru
          _
      $region110: #{tpu_custom_call.1} parent=5 // pred_fallthru
        _
    $region6: #{tpu_custom_call.1} parent=1 // loop_footer
      %s24 = sadd.s32 1, %s20
    $region7: #{tpu_custom_call.1} parent=1 // loop_footer_branch
      %19 = sbr.rel target = $region3
    $region8: #{tpu_custom_call.1} parent=1 // loop_exit
      _
    %998 = vsyncpa [#allocation4], 1
    %s999 = scalar_lea.sflag [#allocation4], 1
    %1000 = vsyncpa %s999, 1
    %1001 = vsyncpa [#allocation7], 1
    %1002 = vsyncpa [#allocation5], 1
    %s1003 = scalar_lea.sflag [#allocation5], 1
    %1004 = vsyncpa %s1003, 1

</llo_original>
